<compile_context>
chip_gen: v6e
topology: v6e:2x2x1
jax: 0.10.0
libtpu: 0.0.40
codegen_flags: <defaults>
</compile_context>

<pallas_src>
import functools

import numpy as np
import jax
import jax.numpy as jnp
from jax.experimental import pallas as pl
from jax.experimental.pallas import tpu as pltpu


_EPS = 1e-30
_MAX_TILE_B = 8192


def _cdiv(a, b):
    return (a + b - 1) // b


def _round_up(x, m):
    return ((x + m - 1) // m) * m


def _sublane_pack(dtype):
    # f32 -> 8 rows/vreg, bf16 -> 16, int8/fp8 -> 32.
    return max(8, 32 // jnp.dtype(dtype).itemsize)


def _vmem_limit_bytes():
    """Generation-aware scoped-VMEM limit (v7x: 64 MiB total; v5e/v6e: 128 MiB)."""
    try:
        cap = pltpu.get_tpu_info().vmem_capacity_bytes
    except Exception:  # pragma: no cover - conservative fallback (v7x per-TC)
        cap = 64 * 1024 * 1024
    return int(min(cap * 3 // 4, 96 * 1024 * 1024))


def _pick_tile_b(b, n_out, dtype, tile_b, vmem_limit):
    """Pick the batch tile: as big as the VMEM budget allows, but leave >=2 grid
    tiles when possible (so both TensorCores get work on v7x)."""
    pack = _sublane_pack(dtype)
    if b <= pack:
        return b  # single full-batch block (block dims == array dims is legal)
    itemsize = jnp.dtype(dtype).itemsize
    # Per-row VMEM footprint: double-buffered output block + double-buffered
    # params block (lane-padded to 128 lanes in VMEM regardless of n_p).
    per_row = 2 * n_out * itemsize + 2 * 128 * itemsize
    budget = max(vmem_limit - (2 << 20), 1 << 20)  # headroom for mix/bias/scratch
    cap = max(pack, (budget // per_row) // pack * pack)
    cap = min(cap, _MAX_TILE_B)
    tb = cap if tile_b is None else min(_round_up(tile_b, pack), cap)
    half = _round_up(_cdiv(b, 2), pack)  # at least 2 grid tiles
    tb = min(tb, max(half, pack))
    return max(pack, tb)


def _build_rows(sfh_bins, n_tau):
    """Static per-bin rows of the scatter-as-matmul mixing matrix (f32, exact)."""
    rows = np.zeros((len(sfh_bins), n_tau), dtype=np.float32)
    for i_bin, (idx_b, idx_e) in enumerate(sfh_bins):
        rows[i_bin, idx_b:idx_e] = 1.0 / (idx_e - idx_b)
    return rows


def _simplex_transform_jnp(p):
    """Plain-JAX replica of the in-kernel simplex transform (no-kernel paths)."""
    p = p.astype(jnp.float32)
    p = -jnp.log(jnp.maximum(1.0 - p, _EPS))
    return p / jnp.maximum(jnp.sum(p, axis=-1, keepdims=True), _EPS)


def _sfh_kernel(*refs, apply_simplex, add_bias, unroll_fma, n_p):
    """One batch tile: optional simplex transform, tiny-K contraction, optional bias."""
    if add_bias:
        p_ref, m_ref, b_ref, o_ref = refs
    else:
        p_ref, m_ref, o_ref = refs
        b_ref = None

    p = p_ref[...].astype(jnp.float32)
    if apply_simplex:
        p = -jnp.log(jnp.maximum(1.0 - p, _EPS))
        denom = jnp.maximum(jnp.sum(p, axis=-1, keepdims=True), _EPS)
        p = p / denom  # exact division: matches the plain-JAX reference

    m = m_ref[...]  # (n_p, n_out), f32, VMEM-resident across tiles

    if unroll_fma:
        # Tiny K: VPU broadcast-FMA instead of a lane-sparse MXU pass; bias is
        # folded in as the accumulator seed.
        out = b_ref[...] if add_bias else jnp.zeros((p.shape[0], m.shape[1]),
                                                    jnp.float32)
        for k in range(n_p):
            out = out + p[:, k:k + 1] * m[k:k + 1, :]
    else:
        out = jnp.dot(p, m, preferred_element_type=jnp.float32)
        if add_bias:
            out = out + b_ref[...]

    o_ref[...] = out.astype(o_ref.dtype)


def discrete_sfh_forward(params, *, sfh_bins, n_tau, simplex_transform=False,
                         tile_b=None, lane_pad="auto", use_pallas=True):
    """JAX wrapper mirroring DiscreteSFH.forward."""
    b = params.shape[0]
    dtype = params.dtype

    if sfh_bins is None:
        # Identity mixing matrix: semantically a copy — skip the kernel entirely.
        n_sfh = n_tau
        if simplex_transform and n_sfh > 2:
            return _simplex_transform_jnp(params).astype(dtype)
        return params

    n_sfh = len(sfh_bins)
    rows = _build_rows(sfh_bins, n_tau)
    apply_simplex = bool(simplex_transform) and n_sfh > 2

    if n_sfh == 1:
        # Output is a constant row independent of params: no kernel, no matmul,
        # no fabricated ones column.
        row = jnp.asarray(rows[0], dtype=dtype)
        return jnp.broadcast_to(row[None, :], (b, n_tau))

    if n_sfh == 2:
        # Fold the '1 - params' extension into a static delta row + bias:
        #   sfh = params @ (row0 - row1) + row1
        p_ext = params                                  # (B, 1)
        mix_np = (rows[0] - rows[1])[None, :]
        bias_np = rows[1][None, :]
        add_bias = True
    else:
        p_ext = params                                  # (B, n_sfh)
        mix_np = rows
        bias_np = None
        add_bias = False

    # Lane-dense output only when the pad fraction is small; for small n_tau the
    # pad + slice round-trip multiplies HBM write traffic and is a net loss.
    if lane_pad == "auto":
        do_pad = (n_tau % 128 != 0) and n_tau >= 512
    else:
        do_pad = bool(lane_pad) and (n_tau % 128 != 0)
    n_out = _round_up(n_tau, 128) if do_pad else n_tau
    if n_out != n_tau:
        mix_np = np.pad(mix_np, ((0, 0), (0, n_out - n_tau)))
        if bias_np is not None:
            bias_np = np.pad(bias_np, ((0, 0), (0, n_out - n_tau)))

    mix = jnp.asarray(mix_np)                 # f32: keeps 1/(idx_e-idx_b) exact
    bias = jnp.asarray(bias_np) if add_bias else None

    if not use_pallas:
        # Tiny-batch escape hatch: let XLA fuse a plain dot with its neighbours.
        p = _simplex_transform_jnp(p_ext) if apply_simplex else p_ext
        out = jnp.dot(p.astype(jnp.float32), mix, preferred_element_type=jnp.float32)
        if add_bias:
            out = out + bias
        return out[:, :n_tau].astype(dtype)

    n_p = p_ext.shape[1]
    vmem_limit = _vmem_limit_bytes()
    tb = _pick_tile_b(b, n_out, dtype, tile_b, vmem_limit)

    kernel = functools.partial(_sfh_kernel,
                               apply_simplex=apply_simplex,
                               add_bias=add_bias,
                               unroll_fma=(n_p <= 8),
                               n_p=n_p)

    in_specs = [
        pl.BlockSpec((tb, n_p), lambda i: (i, 0)),      # batch-tiled, auto-pipelined
        pl.BlockSpec((n_p, n_out), lambda i: (0, 0)),   # VMEM-resident across tiles
    ]
    args = [p_ext, mix]
    if add_bias:
        in_specs.append(pl.BlockSpec((1, n_out), lambda i: (0, 0)))
        args.append(bias)

    out = pl.pallas_call(
        kernel,
        out_shape=jax.ShapeDtypeStruct((b, n_out), dtype),
        grid=(pl.cdiv(b, tb),),
        in_specs=in_specs,
        out_specs=pl.BlockSpec((tb, n_out), lambda i: (i, 0)),
        compiler_params=pltpu.CompilerParams(
            dimension_semantics=("parallel",),          # shards batch tiles across v7x's 2 TCs
            vmem_limit_bytes=vmem_limit,
        ),
    )(*args)

    if n_out != n_tau:
        out = out[:, :n_tau]
    return out


def _reference_forward(params, sfh_bins, n_tau, simplex=False):
    """Pure-numpy replica of the PyTorch forward (sfh_bins given)."""
    params = np.asarray(params, dtype=np.float32)
    n_sfh = len(sfh_bins)
    if simplex and n_sfh > 2:
        p = -np.log(np.maximum(1.0 - params, _EPS))
        params = p / np.maximum(p.sum(axis=-1, keepdims=True), _EPS)
    sfh = np.zeros((params.shape[0], n_tau), dtype=np.float32)
    if n_sfh == 1:
        idx_b, idx_e = sfh_bins[0]
        sfh[:, idx_b:idx_e] = 1.0 / (idx_e - idx_b)
    elif n_sfh == 2:
        (b0, e0), (b1, e1) = sfh_bins
        sfh[:, b0:e0] = params / (e0 - b0)
        sfh[:, b1:e1] = (1.0 - params) / (e1 - b1)
    else:
        for i_bin, (idx_b, idx_e) in enumerate(sfh_bins):
            sfh[:, idx_b:idx_e] = params[:, i_bin, None] / (idx_e - idx_b)
    return sfh


if __name__ == "__main__":
    # Module config: SSP library with n_tau=16 age bins, 4 SFH bins (the gap
    # 8..10 must stay zero).  Batch deliberately NOT divisible by the tile so
    # the ragged last grid tile is exercised.
    n_tau = 16
    sfh_bins = [(0, 3), (3, 8), (10, 14), (14, 16)]
    n_sfh = len(sfh_bins)

    key = jax.random.PRNGKey(0)
    k1, k2 = jax.random.split(key)

    batch = 200
    params = jax.random.uniform(k1, (batch, n_sfh), dtype=jnp.float32)
    ref = _reference_forward(np.array(params), sfh_bins, n_tau)

    # n_sfh > 2, explicit small tile -> 4 grid steps, last one partial (8 rows).
    out = jax.block_until_ready(discrete_sfh_forward(
        params, sfh_bins=sfh_bins, n_tau=n_tau, tile_b=64))
    np.testing.assert_allclose(np.array(out), ref, rtol=1e-6, atol=1e-6)

    # Auto-sized tile (generation-aware VMEM budget, >=2 grid tiles for v7x).
    out_auto = jax.block_until_ready(discrete_sfh_forward(
        params, sfh_bins=sfh_bins, n_tau=n_tau))
    np.testing.assert_allclose(np.array(out_auto), ref, rtol=1e-6, atol=1e-6)

    # Simplex-transform path (n_sfh > 2), exact-division in-kernel transform.
    out_s = jax.block_until_ready(discrete_sfh_forward(
        params, sfh_bins=sfh_bins, n_tau=n_tau, simplex_transform=True, tile_b=64))
    ref_s = _reference_forward(np.array(params), sfh_bins, n_tau, simplex=True)
    np.testing.assert_allclose(np.array(out_s), ref_s, rtol=1e-5, atol=1e-5)

    # n_sfh == 2 path (bias-folded '1 - params' extension, VPU FMA with K=1).
    sfh_bins2 = [(0, 6), (6, 16)]
    params2 = jax.random.uniform(k2, (batch, 1), dtype=jnp.float32)
    out2 = jax.block_until_ready(discrete_sfh_forward(
        params2, sfh_bins=sfh_bins2, n_tau=n_tau, tile_b=64))
    ref2 = _reference_forward(np.array(params2), sfh_bins2, n_tau)
    np.testing.assert_allclose(np.array(out2), ref2, rtol=1e-6, atol=1e-6)

    # n_sfh == 1: constant rows — kernel (and ones column) skipped entirely.
    params1 = jnp.zeros((batch, 0), dtype=jnp.float32)
    out1 = jax.block_until_ready(discrete_sfh_forward(
        params1, sfh_bins=[(2, 10)], n_tau=n_tau))
    ref1 = _reference_forward(np.zeros((batch, 0), np.float32), [(2, 10)], n_tau)
    np.testing.assert_allclose(np.array(out1), ref1, rtol=0, atol=0)

    # sfh_bins=None path is semantically a copy — kernel skipped.
    out_none = discrete_sfh_forward(params, sfh_bins=None, n_tau=n_sfh)
    np.testing.assert_allclose(np.array(out_none), np.array(params), rtol=0, atol=0)

    print("KERNEL_OK")
</pallas_src>

<mosaic_0001>
module attributes {stable_mosaic.version = 11 : i64} {
  func.func @_sfh_kernel(%arg0: i32, %arg1: memref<64x4xf32, #tpu.memory_space<vmem>>, %arg2: memref<4x16xf32, #tpu.memory_space<vmem>>, %arg3: memref<64x16xf32, #tpu.memory_space<vmem>>) attributes {dimension_semantics = [#tpu.dimension_semantics<parallel>], iteration_bounds = array<i64: 4>, scalar_prefetch = 0 : i64, scratch_operands = 0 : i64, tpu.core_type = #tpu.core_type<tc>, window_params = [{transform_indices = @transform_0, window_bounds = array<i64: 64, 4>}, {pipeline_mode = #tpu.pipeline_mode<synchronous>, transform_indices = @transform_1, window_bounds = array<i64: 4, 16>}, {transform_indices = @transform_2, window_bounds = array<i64: 64, 16>}]} {
    %c0 = arith.constant 0 : index
    %c0_0 = arith.constant 0 : index
    %0 = vector.load %arg1[%c0, %c0_0] : memref<64x4xf32, #tpu.memory_space<vmem>>, vector<64x4xf32>
    %c0_1 = arith.constant 0 : index
    %c0_2 = arith.constant 0 : index
    %1 = vector.load %arg2[%c0_1, %c0_2] : memref<4x16xf32, #tpu.memory_space<vmem>>, vector<4x16xf32>
    %cst = arith.constant 0.000000e+00 : f32
    %2 = vector.broadcast %cst : f32 to vector<64x16xf32>
    %3 = vector.extract_strided_slice %0 {offsets = [0, 0], sizes = [64, 1], strides = [1, 1]} : vector<64x4xf32> to vector<64x1xf32>
    %4 = vector.extract_strided_slice %1 {offsets = [0, 0], sizes = [1, 16], strides = [1, 1]} : vector<4x16xf32> to vector<1x16xf32>
    %5 = vector.broadcast %3 : vector<64x1xf32> to vector<64x16xf32>
    %6 = vector.broadcast %4 : vector<1x16xf32> to vector<64x16xf32>
    %7 = arith.mulf %5, %6 : vector<64x16xf32>
    %8 = arith.addf %2, %7 : vector<64x16xf32>
    %9 = vector.extract_strided_slice %0 {offsets = [0, 1], sizes = [64, 1], strides = [1, 1]} : vector<64x4xf32> to vector<64x1xf32>
    %10 = vector.extract_strided_slice %1 {offsets = [1, 0], sizes = [1, 16], strides = [1, 1]} : vector<4x16xf32> to vector<1x16xf32>
    %11 = vector.broadcast %9 : vector<64x1xf32> to vector<64x16xf32>
    %12 = vector.broadcast %10 : vector<1x16xf32> to vector<64x16xf32>
    %13 = arith.mulf %11, %12 : vector<64x16xf32>
    %14 = arith.addf %8, %13 : vector<64x16xf32>
    %15 = vector.extract_strided_slice %0 {offsets = [0, 2], sizes = [64, 1], strides = [1, 1]} : vector<64x4xf32> to vector<64x1xf32>
    %16 = vector.extract_strided_slice %1 {offsets = [2, 0], sizes = [1, 16], strides = [1, 1]} : vector<4x16xf32> to vector<1x16xf32>
    %17 = vector.broadcast %15 : vector<64x1xf32> to vector<64x16xf32>
    %18 = vector.broadcast %16 : vector<1x16xf32> to vector<64x16xf32>
    %19 = arith.mulf %17, %18 : vector<64x16xf32>
    %20 = arith.addf %14, %19 : vector<64x16xf32>
    %21 = vector.extract_strided_slice %0 {offsets = [0, 3], sizes = [64, 1], strides = [1, 1]} : vector<64x4xf32> to vector<64x1xf32>
    %22 = vector.extract_strided_slice %1 {offsets = [3, 0], sizes = [1, 16], strides = [1, 1]} : vector<4x16xf32> to vector<1x16xf32>
    %23 = vector.broadcast %21 : vector<64x1xf32> to vector<64x16xf32>
    %24 = vector.broadcast %22 : vector<1x16xf32> to vector<64x16xf32>
    %25 = arith.mulf %23, %24 : vector<64x16xf32>
    %26 = arith.addf %20, %25 : vector<64x16xf32>
    %c0_3 = arith.constant 0 : index
    %c0_4 = arith.constant 0 : index
    %27 = vector.load %arg3[%c0_3, %c0_4] : memref<64x16xf32, #tpu.memory_space<vmem>>, vector<64x16xf32>
    tpu.vector_store %arg3[%c0_3, %c0_4], %26 {strides = array<i32>} : memref<64x16xf32, #tpu.memory_space<vmem>>, vector<64x16xf32>,
    return
  }
  func.func @transform_0(%arg0: i32) -> (i32, i32) {
    %c0_i32 = arith.constant 0 : i32
    %c0_i32_0 = arith.constant 0 : i32
    return %arg0, %c0_i32 : i32, i32
  }
  func.func @transform_1(%arg0: i32) -> (i32, i32) {
    %c0_i32 = arith.constant 0 : i32
    %c0_i32_0 = arith.constant 0 : i32
    %c0_i32_1 = arith.constant 0 : i32
    return %c0_i32, %c0_i32_0 : i32, i32
  }
  func.func @transform_2(%arg0: i32) -> (i32, i32) {
    %c0_i32 = arith.constant 0 : i32
    %c0_i32_0 = arith.constant 0 : i32
    return %arg0, %c0_i32 : i32, i32
  }
}

</mosaic_0001>

<llo_original>
// kernel: tpu_custom_call.1
$region0: #{tpu_custom_call.1}
  #allocation0 [shape = 'u32[]', space=smem, size = 0x4, offset = 0x4, fixed_abs, tag = 'smem constant byte address 0x4 - core index']
  #allocation1 [shape = 'u32[144,128]{1,0:T(1,128)}', space=vmem, size = 0x12000, scoped, tag = 'internal scratch']
  %s0 = inlined_call_operand.vmem [shape: f32[200,4], index: 0, kind: input, shape index: {}]
  %s1 = inlined_call_operand.vmem [shape: f32[4,16], index: 1, kind: input, shape index: {}]
  %s2 = inlined_call_operand.vmem [shape: f32[200,16], index: 2, kind: output, shape index: {}]
  %s3 = sld [smem:[#allocation0]]
  $region89: #{tpu_custom_call.1} parent=0
    _
  %s5 = ssub.s32 1, %s3
  %s6 = scalar_select 0, %s5, %s3
  $region1: #{tpu_custom_call.1} parent=0
    #allocation2 [shape = 'u8[65536]{0}', space=vmem, size = 0x10000, scoped, tag = 'output window, operand 0']
    loop: start=0, step=1, limit=6
    $region2: #{tpu_custom_call.1} parent=1 // loop_pre_header
      _
    $region3: #{tpu_custom_call.1} parent=1 // loop_header
      %s8 = sphi 0, %s12
      %p9 = scmp.ge.s32.totalorder %s8, 6
      %s18 = sphi 0, %s20
      %s21 = sphi 0, %s18
      %s22 = sphi 0, %s21
      %s38 = sphi 0, %s22
      %s42 = sphi 0, %s42
      %s44 = sphi 0, %s42
      %s45 = sphi 0, %s44
      %s59 = sphi 0, %s45
      %s65 = sphi 0, %s67
      %s68 = sphi 0, %s65
      %s69 = sphi 0, %s68
      %s85 = sphi 0, %s69
    $region4: #{tpu_custom_call.1} parent=1 // loop_header_branch
      %11 = sbr.rel (%p9) target = $region8
    $region5: #{tpu_custom_call.1} parent=1 // loop_body
      %s13 = ssub.s32 %s8, 1
      %s14 = ssub.s32 %s8, 2
      %s15 = sadd.s32 %s8, 1
      %s16 = ssub.s32 %s8, %s15
      %p17 = scmp.eq.s32.totalorder %s16, 0
      %s19 = sadd.s32 %s18, 1
      %s20 = scalar_select %p17, %s18, %s19
      %p23 = pneg %p17
      %p24 = scmp.eq.s32.totalorder %s8, 3
      %p25 = por %p23, %p24
      %p26 = scmp.ne.s32.totalorder %s18, %s21
      %p27 = scmp.eq.s32.totalorder %s8, 0
      %p28 = por %p26, %p27
      %p29 = scmp.ne.s32.totalorder %s18, %s21
      %p30 = scmp.eq.s32.totalorder %s13, 3
      %p31 = por %p29, %p30
      %p32 = scmp.ne.s32.totalorder %s21, %s22
      %p33 = scmp.eq.s32.totalorder %s13, 0
      %p34 = por %p32, %p33
      %p35 = scmp.ne.s32.totalorder %s21, %s22
      %p36 = scmp.eq.s32.totalorder %s14, 3
      %p37 = por %p35, %p36
      %p39 = scmp.ne.s32.totalorder %s22, %s38
      %p40 = scmp.eq.s32.totalorder %s14, 0
      %p41 = por %p39, %p40
      %s43 = sadd.s32 %s42, 1
      %p46 = scmp.eq.s32.totalorder %s8, 3
      %p47 = scmp.ne.s32.totalorder %s42, %s44
      %p48 = scmp.eq.s32.totalorder %s8, 0
      %p49 = por %p47, %p48
      %p50 = scmp.ne.s32.totalorder %s42, %s44
      %p51 = scmp.eq.s32.totalorder %s13, 3
      %p52 = por %p50, %p51
      %p53 = scmp.ne.s32.totalorder %s44, %s45
      %p54 = scmp.eq.s32.totalorder %s13, 0
      %p55 = por %p53, %p54
      %p56 = scmp.ne.s32.totalorder %s44, %s45
      %p57 = scmp.eq.s32.totalorder %s14, 3
      %p58 = por %p56, %p57
      %p60 = scmp.ne.s32.totalorder %s45, %s59
      %p61 = scmp.eq.s32.totalorder %s14, 0
      %p62 = por %p60, %p61
      %s63 = ssub.s32 %s8, %s15
      %p64 = scmp.eq.s32.totalorder %s63, 0
      %s66 = sadd.s32 %s65, 1
      %s67 = scalar_select %p64, %s65, %s66
      %p70 = pneg %p64
      %p71 = scmp.eq.s32.totalorder %s8, 3
      %p72 = por %p70, %p71
      %p73 = scmp.ne.s32.totalorder %s65, %s68
      %p74 = scmp.eq.s32.totalorder %s8, 0
      %p75 = por %p73, %p74
      %p76 = scmp.ne.s32.totalorder %s65, %s68
      %p77 = scmp.eq.s32.totalorder %s13, 3
      %p78 = por %p76, %p77
      %p79 = scmp.ne.s32.totalorder %s68, %s69
      %p80 = scmp.eq.s32.totalorder %s13, 0
      %p81 = por %p79, %p80
      %p82 = scmp.ne.s32.totalorder %s68, %s69
      %p83 = scmp.eq.s32.totalorder %s14, 3
      %p84 = por %p82, %p83
      %p86 = scmp.ne.s32.totalorder %s69, %s85
      %p87 = scmp.eq.s32.totalorder %s14, 0
      %p88 = por %p86, %p87
      %p89 = scmp.le.s32.totalorder 1, %s8
      %p90 = scmp.lt.s32.totalorder %s8, 5
      %p91 = pnand %p89, %p90
      %p92 = pneg %p91
      // Predicated region
      $region9: #{tpu_custom_call.1} parent=5 // pred_check
        _
      $region10: #{tpu_custom_call.1} parent=5 // pred_check_branch
        %94 = sbr.rel (%p91) target = $region12
      $region11: #{tpu_custom_call.1} parent=5 // pred_region
        %s95 = ssub.s32 %s8, 1
        // Predicated region
        $region13: #{tpu_custom_call.1} parent=11 // pred_check
          %p96 = pneg %p55
        $region14: #{tpu_custom_call.1} parent=11 // pred_check_branch
          %98 = sbr.rel (%p96) target = $region16
        $region15: #{tpu_custom_call.1} parent=11 // pred_region
          _
        $region16: #{tpu_custom_call.1} parent=11 // pred_fallthru
          _
      $region12: #{tpu_custom_call.1} parent=5 // pred_fallthru
        _
      %p99 = scmp.lt.s32.totalorder %s8, 4
      // Predicated region
      $region17: #{tpu_custom_call.1} parent=5 // pred_check
        %p100 = pneg %p99
      $region18: #{tpu_custom_call.1} parent=5 // pred_check_branch
        %102 = sbr.rel (%p100) target = $region20
      $region19: #{tpu_custom_call.1} parent=5 // pred_region
        // Predicated region
        $region21: #{tpu_custom_call.1} parent=19 // pred_check
          %p103 = pneg %p28
        $region22: #{tpu_custom_call.1} parent=19 // pred_check_branch
          %105 = sbr.rel (%p103) target = $region24
        $region23: #{tpu_custom_call.1} parent=19 // pred_region
          %s106 = smul.u32 8, %s8
          %s107 = ssub.s32 25, %s106
          %p108 = scmp.lt.s32.totalorder %s107, 8
          %s109 = scalar_select %p108, %s107, 8
          %s110 = smul.u32 128, %s109
          %p111 = scmp.lt.s32.totalorder %s106, 24
          %s112 = scalar_select %p111, %s106, 24
          %s113 = smul.addr %s112, 8
          %s114 = scalar_lea.vmem %s0, %s113
          %s115 = smul.u32 8, %s8
          %s116 = ssub.s32 25, %s115
          %p117 = scmp.lt.s32.totalorder %s116, 8
          %s118 = scalar_select %p117, %s116, 8
          %s119 = smul.u32 128, %s118
        $region24: #{tpu_custom_call.1} parent=19 // pred_fallthru
          _
      $region20: #{tpu_custom_call.1} parent=5 // pred_fallthru
        _
      %p120 = scmp.le.s32.totalorder 1, %s8
      %p121 = scmp.lt.s32.totalorder %s8, 5
      %p122 = pnand %p120, %p121
      %p123 = pneg %p122
      // Predicated region
      $region25: #{tpu_custom_call.1} parent=5 // pred_check
        _
      $region26: #{tpu_custom_call.1} parent=5 // pred_check_branch
        %125 = sbr.rel (%p122) target = $region28
      $region27: #{tpu_custom_call.1} parent=5 // pred_region
        %s126 = ssub.s32 %s8, 1
        %s127 = smul.u32 8, %s13
        %s128 = ssub.s32 25, %s127
        %p129 = scmp.lt.s32.totalorder %s128, 8
        %s130 = scalar_select %p129, %s128, 8
        %s131 = smul.u32 128, %s130
        %p132 = scmp.lt.s32.totalorder %s127, 24
        %s133 = scalar_select %p132, %s127, 24
        %s134 = smul.addr %s133, 8
        %s135 = scalar_lea.vmem %s0, %s134
        %p136 = pneg %p34
        %p137 = pneg %p31
        %p138 = pneg %p55
        %p139 = pneg %p52
        %p140 = pneg %p81
        %p141 = pneg %p78
        %s142 = sand.u32 %s68, 1
        %s143 = sand.u32 %s68, 1
        %s144 = smul.addr %s143, 64
        %s145 = scalar_lea.vmem [#allocation2], %s144
        %s146 = smul.u32 8, %s13
        %s147 = ssub.s32 25, %s146
        %p148 = scmp.lt.s32.totalorder %s147, 8
        %s149 = scalar_select %p148, %s147, 8
        %s150 = smul.u32 128, %s149
        %p151 = scmp.lt.s32.totalorder %s146, 24
        %s152 = scalar_select %p151, %s146, 24
        %s153 = smul.addr %s152, 8
        %s154 = scalar_lea.vmem %s0, %s153
        %s155 = smul.u32 8, %s13
        %s156 = ssub.s32 25, %s155
        %p157 = scmp.lt.s32.totalorder %s156, 8
        %s158 = scalar_select %p157, %s156, 8
        %s159 = smul.u32 128, %s158
        %s160 = smul.u32 8, %s13
        %s161 = ssub.s32 25, %s160
        %p162 = scmp.lt.s32.totalorder %s161, 8
        %s163 = scalar_select %p162, %s161, 8
        %s164 = smul.u32 128, %s163
        %v165 = vld [vmem:[%s154] sm:$0xff]
        %v166 = vld [vmem:[%s154 + $0x8] sm:$0xff]
        %v167 = vld [vmem:[%s154 + $0x10] sm:$0xff]
        %v168 = vld [vmem:[%s154 + $0x18] sm:$0xff]
        %v169 = vld [vmem:[%s154 + $0x20] sm:$0xff]
        %v170 = vld [vmem:[%s154 + $0x28] sm:$0xff]
        %v171 = vld [vmem:[%s154 + $0x30] sm:$0xff]
        %v172 = vld [vmem:[%s154 + $0x38] sm:$0xff]
        %v173 = vld [vmem:[%s1] sm:$0xf]
        %175 = vset.pattern.permute.xlu0 0
        %176 = vperm.xlu0 %175, %v165
        %v177 = vpop.permute.xlu0 %176
        %180 = vset.pattern.permute.xlu0 0
        %181 = vperm.xlu0 %180, %v166
        %v182 = vpop.permute.xlu0 %181
        %185 = vset.pattern.permute.xlu0 0
        %186 = vperm.xlu0 %185, %v167
        %v187 = vpop.permute.xlu0 %186
        %190 = vset.pattern.permute.xlu0 0
        %191 = vperm.xlu0 %190, %v168
        %v192 = vpop.permute.xlu0 %191
        %195 = vset.pattern.permute.xlu0 0
        %196 = vperm.xlu0 %195, %v169
        %v197 = vpop.permute.xlu0 %196
        %200 = vset.pattern.permute.xlu0 0
        %201 = vperm.xlu0 %200, %v170
        %v202 = vpop.permute.xlu0 %201
        %205 = vset.pattern.permute.xlu0 0
        %206 = vperm.xlu0 %205, %v171
        %v207 = vpop.permute.xlu0 %206
        %210 = vset.pattern.permute.xlu0 0
        %211 = vperm.xlu0 %210, %v172
        %v212 = vpop.permute.xlu0 %211
        %v214 = vlaneseq
        %v215 = vshrl.u32 %v214, 7
        %v216 = vsub.s32 0, %v215
        %v217 = vrot.slane %v173, %v216
        %v218 = vmul.f32 %v177, %v217
        %v219 = vmul.f32 %v182, %v217
        %v220 = vmul.f32 %v187, %v217
        %v221 = vmul.f32 %v192, %v217
        %v222 = vmul.f32 %v197, %v217
        %v223 = vmul.f32 %v202, %v217
        %v224 = vmul.f32 %v207, %v217
        %v225 = vmul.f32 %v212, %v217
        %v226 = vadd.f32 %v218, 0.0
        %v227 = vadd.f32 %v219, 0.0
        %v228 = vadd.f32 %v220, 0.0
        %v229 = vadd.f32 %v221, 0.0
        %v230 = vadd.f32 %v222, 0.0
        %v231 = vadd.f32 %v223, 0.0
        %v232 = vadd.f32 %v224, 0.0
        %v233 = vadd.f32 %v225, 0.0
        %234 = vset.pattern.permute.xlu0 1
        %235 = vperm.xlu0 %234, %v165
        %v236 = vpop.permute.xlu0 %235
        %238 = vset.pattern.permute.xlu0 1
        %239 = vperm.xlu0 %238, %v166
        %v240 = vpop.permute.xlu0 %239
        %242 = vset.pattern.permute.xlu0 1
        %243 = vperm.xlu0 %242, %v167
        %v244 = vpop.permute.xlu0 %243
        %246 = vset.pattern.permute.xlu0 1
        %247 = vperm.xlu0 %246, %v168
        %v248 = vpop.permute.xlu0 %247
        %250 = vset.pattern.permute.xlu0 1
        %251 = vperm.xlu0 %250, %v169
        %v252 = vpop.permute.xlu0 %251
        %254 = vset.pattern.permute.xlu0 1
        %255 = vperm.xlu0 %254, %v170
        %v256 = vpop.permute.xlu0 %255
        %258 = vset.pattern.permute.xlu0 1
        %259 = vperm.xlu0 %258, %v171
        %v260 = vpop.permute.xlu0 %259
        %262 = vset.pattern.permute.xlu0 1
        %263 = vperm.xlu0 %262, %v172
        %v264 = vpop.permute.xlu0 %263
        %v266 = vlaneseq
        %v267 = vshrl.u32 %v266, 7
        %v268 = vsub.s32 1, %v267
        %v269 = vrot.slane %v173, %v268
        %v270 = vmul.f32 %v236, %v269
        %v271 = vmul.f32 %v240, %v269
        %v272 = vmul.f32 %v244, %v269
        %v273 = vmul.f32 %v248, %v269
        %v274 = vmul.f32 %v252, %v269
        %v275 = vmul.f32 %v256, %v269
        %v276 = vmul.f32 %v260, %v269
        %v277 = vmul.f32 %v264, %v269
        %v278 = vadd.f32 %v226, %v270
        %v279 = vadd.f32 %v227, %v271
        %v280 = vadd.f32 %v228, %v272
        %v281 = vadd.f32 %v229, %v273
        %v282 = vadd.f32 %v230, %v274
        %v283 = vadd.f32 %v231, %v275
        %v284 = vadd.f32 %v232, %v276
        %v285 = vadd.f32 %v233, %v277
        %286 = vset.pattern.permute.xlu0 2
        %287 = vperm.xlu0 %286, %v165
        %v288 = vpop.permute.xlu0 %287
        %290 = vset.pattern.permute.xlu0 2
        %291 = vperm.xlu0 %290, %v166
        %v292 = vpop.permute.xlu0 %291
        %294 = vset.pattern.permute.xlu0 2
        %295 = vperm.xlu0 %294, %v167
        %v296 = vpop.permute.xlu0 %295
        %298 = vset.pattern.permute.xlu0 2
        %299 = vperm.xlu0 %298, %v168
        %v300 = vpop.permute.xlu0 %299
        %302 = vset.pattern.permute.xlu0 2
        %303 = vperm.xlu0 %302, %v169
        %v304 = vpop.permute.xlu0 %303
        %306 = vset.pattern.permute.xlu0 2
        %307 = vperm.xlu0 %306, %v170
        %v308 = vpop.permute.xlu0 %307
        %310 = vset.pattern.permute.xlu0 2
        %311 = vperm.xlu0 %310, %v171
        %v312 = vpop.permute.xlu0 %311
        %314 = vset.pattern.permute.xlu0 2
        %315 = vperm.xlu0 %314, %v172
        %v316 = vpop.permute.xlu0 %315
        %v318 = vlaneseq
        %v319 = vshrl.u32 %v318, 7
        %v320 = vsub.s32 2, %v319
        %v321 = vrot.slane %v173, %v320
        %v322 = vmul.f32 %v288, %v321
        %v323 = vmul.f32 %v292, %v321
        %v324 = vmul.f32 %v296, %v321
        %v325 = vmul.f32 %v300, %v321
        %v326 = vmul.f32 %v304, %v321
        %v327 = vmul.f32 %v308, %v321
        %v328 = vmul.f32 %v312, %v321
        %v329 = vmul.f32 %v316, %v321
        %v330 = vadd.f32 %v278, %v322
        %v331 = vadd.f32 %v279, %v323
        %v332 = vadd.f32 %v280, %v324
        %v333 = vadd.f32 %v281, %v325
        %v334 = vadd.f32 %v282, %v326
        %v335 = vadd.f32 %v283, %v327
        %v336 = vadd.f32 %v284, %v328
        %v337 = vadd.f32 %v285, %v329
        %338 = vset.pattern.permute.xlu0 3
        %339 = vperm.xlu0 %338, %v165
        %v340 = vpop.permute.xlu0 %339
        %342 = vset.pattern.permute.xlu0 3
        %343 = vperm.xlu0 %342, %v166
        %v344 = vpop.permute.xlu0 %343
        %346 = vset.pattern.permute.xlu0 3
        %347 = vperm.xlu0 %346, %v167
        %v348 = vpop.permute.xlu0 %347
        %350 = vset.pattern.permute.xlu0 3
        %351 = vperm.xlu0 %350, %v168
        %v352 = vpop.permute.xlu0 %351
        %354 = vset.pattern.permute.xlu0 3
        %355 = vperm.xlu0 %354, %v169
        %v356 = vpop.permute.xlu0 %355
        %358 = vset.pattern.permute.xlu0 3
        %359 = vperm.xlu0 %358, %v170
        %v360 = vpop.permute.xlu0 %359
        %362 = vset.pattern.permute.xlu0 3
        %363 = vperm.xlu0 %362, %v171
        %v364 = vpop.permute.xlu0 %363
        %366 = vset.pattern.permute.xlu0 3
        %367 = vperm.xlu0 %366, %v172
        %v368 = vpop.permute.xlu0 %367
        %v370 = vlaneseq
        %v371 = vshrl.u32 %v370, 7
        %v372 = vsub.s32 3, %v371
        %v373 = vrot.slane %v173, %v372
        %v374 = vmul.f32 %v340, %v373
        %v375 = vmul.f32 %v344, %v373
        %v376 = vmul.f32 %v348, %v373
        %v377 = vmul.f32 %v352, %v373
        %v378 = vmul.f32 %v356, %v373
        %v379 = vmul.f32 %v360, %v373
        %v380 = vmul.f32 %v364, %v373
        %v381 = vmul.f32 %v368, %v373
        %v382 = vadd.f32 %v330, %v374
        %v383 = vadd.f32 %v331, %v375
        %v384 = vadd.f32 %v332, %v376
        %v385 = vadd.f32 %v333, %v377
        %v386 = vadd.f32 %v334, %v378
        %v387 = vadd.f32 %v335, %v379
        %v388 = vadd.f32 %v336, %v380
        %v389 = vadd.f32 %v337, %v381
        %vm390 = vcmask 130048
        %391 = vst.msk [vmem:[%s145] sm:$0xff] %vm390, %v382
        %392 = vst.msk [vmem:[%s145 + $0x8] sm:$0xff] %vm390, %v383
        %393 = vst.msk [vmem:[%s145 + $0x10] sm:$0xff] %vm390, %v384
        %394 = vst.msk [vmem:[%s145 + $0x18] sm:$0xff] %vm390, %v385
        %395 = vst.msk [vmem:[%s145 + $0x20] sm:$0xff] %vm390, %v386
        %396 = vst.msk [vmem:[%s145 + $0x28] sm:$0xff] %vm390, %v387
        %397 = vst.msk [vmem:[%s145 + $0x30] sm:$0xff] %vm390, %v388
        %398 = vst.msk [vmem:[%s145 + $0x38] sm:$0xff] %vm390, %v389
        %s399 = sand.u32 %s68, 1
        %s400 = sand.u32 %s68, 1
        %s401 = smul.addr %s400, 64
        %s402 = scalar_lea.vmem [#allocation2], %s401
        // Predicated region
        $region29: #{tpu_custom_call.1} parent=27 // pred_check
          %p403 = pneg %p78
        $region30: #{tpu_custom_call.1} parent=27 // pred_check_branch
          %405 = sbr.rel (%p403) target = $region32
        $region31: #{tpu_custom_call.1} parent=27 // pred_region
          %s406 = smul.u32 8, %s13
          %s407 = ssub.s32 25, %s406
          %p408 = scmp.lt.s32.totalorder %s407, 8
          %s409 = scalar_select %p408, %s407, 8
          %s410 = smul.u32 128, %s409
          %p411 = scmp.ne.s32.totalorder 0, %s410
          %s412 = smul.addr %s406, 8
          %s413 = scalar_lea.vmem %s2, %s412
          // Predicated region
          $region33: #{tpu_custom_call.1} parent=31 // pred_check
            %p414 = pneg %p411
          $region34: #{tpu_custom_call.1} parent=31 // pred_check_branch
            %416 = sbr.rel (%p414) target = $region36
          $region35: #{tpu_custom_call.1} parent=31 // pred_region
            // Predicated region
            $region37: #{tpu_custom_call.1} parent=35 // pred_check
              _
            $region38: #{tpu_custom_call.1} parent=35 // pred_check_branch
              %418 = sbr.rel (0) target = $region40
            $region39: #{tpu_custom_call.1} parent=35 // pred_region
              // Predicated region
              $region59: #{tpu_custom_call.1} parent=39 // pred_check
                _
              $region60: #{tpu_custom_call.1} parent=39 // pred_check_branch
                %482 = sbr.rel (0) target = $region62
              $region61: #{tpu_custom_call.1} parent=39 // pred_region
                %s483 = sshrl.u32 %s409, 3
                // While loop
                $region63: #{tpu_custom_call.1} parent=61 // loop_pre_header
                  _
                $region64: #{tpu_custom_call.1} parent=61 // loop_header
                  %s485 = sphi 0, %s487
                  %p486 = scmp.ge.s32.totalorder %s485, %s483
                  %s490 = sphi 0, %s511
                  %s491 = sphi %s402, %s514
                  %s492 = sphi %s413, %s515
                $region65: #{tpu_custom_call.1} parent=61 // loop_header_branch
                  %489 = sbr.rel (%p486) target = $region69
                $region66: #{tpu_custom_call.1} parent=61 // loop_body
                  %v493 = vld [vmem:[%s491] sm:$0xff]
                  %494 = vst [vmem:[%s492] sm:$0xff] %v493
                  %v495 = vld [vmem:[%s491 + $0x8] sm:$0xff]
                  %496 = vst [vmem:[%s492 + $0x8] sm:$0xff] %v495
                  %v497 = vld [vmem:[%s491 + $0x10] sm:$0xff]
                  %498 = vst [vmem:[%s492 + $0x10] sm:$0xff] %v497
                  %v499 = vld [vmem:[%s491 + $0x18] sm:$0xff]
                  %500 = vst [vmem:[%s492 + $0x18] sm:$0xff] %v499
                  %v501 = vld [vmem:[%s491 + $0x20] sm:$0xff]
                  %502 = vst [vmem:[%s492 + $0x20] sm:$0xff] %v501
                  %v503 = vld [vmem:[%s491 + $0x28] sm:$0xff]
                  %504 = vst [vmem:[%s492 + $0x28] sm:$0xff] %v503
                  %v505 = vld [vmem:[%s491 + $0x30] sm:$0xff]
                  %506 = vst [vmem:[%s492 + $0x30] sm:$0xff] %v505
                  %v507 = vld [vmem:[%s491 + $0x38] sm:$0xff]
                  %508 = vst [vmem:[%s492 + $0x38] sm:$0xff] %v507
                  %s509 = sadd.s32 1, %s490
                  %p510 = scmp.ge.s32.totalorder %s509, %s483
                  %s511 = scalar_select %p510, 0, %s509
                  %s512 = smul.u32 %s511, 64
                  %s513 = smul.u32 %s511, 64
                  %s514 = scalar_lea.vmem %s402, %s512 [#allocation2]
                  %s515 = scalar_lea.vmem %s413, %s513
                $region67: #{tpu_custom_call.1} parent=61 // loop_footer
                  %s487 = sadd.s32 %s485, 1
                $region68: #{tpu_custom_call.1} parent=61 // loop_footer_branch
                  %484 = sbr.rel target = $region64
                $region69: #{tpu_custom_call.1} parent=61 // loop_exit
                  _
                %s516 = sshrl.u32 %s409, 3
                %s517 = sand.u32 %s409, 7
                %s518 = smul.u32 %s516, 8
                %s519 = smul.u32 8, %s518
                %s520 = scalar_lea.vmem %s402, %s519 [#allocation2]
                %s521 = smul.u32 8, %s518
                %s522 = scalar_lea.vmem %s413, %s521
                // While loop
                $region70: #{tpu_custom_call.1} parent=61 // loop_pre_header
                  _
                $region71: #{tpu_custom_call.1} parent=61 // loop_header
                  %s524 = sphi 0, %s526
                  %p525 = scmp.ge.s32.totalorder %s524, %s517
                  %s529 = sphi 0, %s536
                  %s530 = sphi %s520, %s539
                  %s531 = sphi %s522, %s540
                $region72: #{tpu_custom_call.1} parent=61 // loop_header_branch
                  %528 = sbr.rel (%p525) target = $region76
                $region73: #{tpu_custom_call.1} parent=61 // loop_body
                  %v532 = vld [vmem:[%s530] sm:$0xff]
                  %533 = vst [vmem:[%s531] sm:$0xff] %v532
                  %s534 = sadd.s32 1, %s529
                  %p535 = scmp.ge.s32.totalorder %s534, %s517
                  %s536 = scalar_select %p535, 0, %s534
                  %s537 = smul.u32 %s536, 8
                  %s538 = smul.u32 %s536, 8
                  %s539 = scalar_lea.vmem %s520, %s537 [#allocation2]
                  %s540 = scalar_lea.vmem %s522, %s538
                $region74: #{tpu_custom_call.1} parent=61 // loop_footer
                  %s526 = sadd.s32 %s524, 1
                $region75: #{tpu_custom_call.1} parent=61 // loop_footer_branch
                  %523 = sbr.rel target = $region71
                $region76: #{tpu_custom_call.1} parent=61 // loop_exit
                  _
              $region62: #{tpu_custom_call.1} parent=39 // pred_fallthru
                _
              // Predicated region
              $region77: #{tpu_custom_call.1} parent=39 // pred_check
                _
              $region78: #{tpu_custom_call.1} parent=39 // pred_check_branch
                %542 = sbr.rel target = $region80
              $region79: #{tpu_custom_call.1} parent=39 // pred_region
                _
              $region80: #{tpu_custom_call.1} parent=39 // pred_fallthru
                _
            $region40: #{tpu_custom_call.1} parent=35 // pred_fallthru
              _
            // Predicated region
            $region41: #{tpu_custom_call.1} parent=35 // pred_check
              _
            $region42: #{tpu_custom_call.1} parent=35 // pred_check_branch
              %420 = sbr.rel target = $region44
            $region43: #{tpu_custom_call.1} parent=35 // pred_region
              %s422 = ssub.s32 256, 1
              %s423 = sshrl.u32 %s409, 3
              // While loop
              $region45: #{tpu_custom_call.1} parent=43 // loop_pre_header
                _
              $region46: #{tpu_custom_call.1} parent=43 // loop_header
                %s425 = sphi 0, %s427
                %p426 = scmp.ge.s32.totalorder %s425, %s423
                %s430 = sphi 0, %s451
                %s431 = sphi %s402, %s454
                %s432 = sphi %s413, %s455
              $region47: #{tpu_custom_call.1} parent=43 // loop_header_branch
                %429 = sbr.rel (%p426) target = $region51
              $region48: #{tpu_custom_call.1} parent=43 // loop_body
                %v433 = vld [vmem:[%s431] sm:%s422]
                %434 = vst [vmem:[%s432] sm:%s422] %v433
                %v435 = vld [vmem:[%s431 + $0x8] sm:%s422]
                %436 = vst [vmem:[%s432 + $0x8] sm:%s422] %v435
                %v437 = vld [vmem:[%s431 + $0x10] sm:%s422]
                %438 = vst [vmem:[%s432 + $0x10] sm:%s422] %v437
                %v439 = vld [vmem:[%s431 + $0x18] sm:%s422]
                %440 = vst [vmem:[%s432 + $0x18] sm:%s422] %v439
                %v441 = vld [vmem:[%s431 + $0x20] sm:%s422]
                %442 = vst [vmem:[%s432 + $0x20] sm:%s422] %v441
                %v443 = vld [vmem:[%s431 + $0x28] sm:%s422]
                %444 = vst [vmem:[%s432 + $0x28] sm:%s422] %v443
                %v445 = vld [vmem:[%s431 + $0x30] sm:%s422]
                %446 = vst [vmem:[%s432 + $0x30] sm:%s422] %v445
                %v447 = vld [vmem:[%s431 + $0x38] sm:%s422]
                %448 = vst [vmem:[%s432 + $0x38] sm:%s422] %v447
                %s449 = sadd.s32 1, %s430
                %p450 = scmp.ge.s32.totalorder %s449, %s423
                %s451 = scalar_select %p450, 0, %s449
                %s452 = smul.u32 %s451, 64
                %s453 = smul.u32 %s451, 64
                %s454 = scalar_lea.vmem %s402, %s452 [#allocation2]
                %s455 = scalar_lea.vmem %s413, %s453
              $region49: #{tpu_custom_call.1} parent=43 // loop_footer
                %s427 = sadd.s32 %s425, 1
              $region50: #{tpu_custom_call.1} parent=43 // loop_footer_branch
                %424 = sbr.rel target = $region46
              $region51: #{tpu_custom_call.1} parent=43 // loop_exit
                _
              %s456 = sshrl.u32 %s409, 3
              %s457 = sand.u32 %s409, 7
              %s458 = smul.u32 %s456, 8
              %s459 = smul.u32 8, %s458
              %s460 = scalar_lea.vmem %s402, %s459 [#allocation2]
              %s461 = smul.u32 8, %s458
              %s462 = scalar_lea.vmem %s413, %s461
              // While loop
              $region52: #{tpu_custom_call.1} parent=43 // loop_pre_header
                _
              $region53: #{tpu_custom_call.1} parent=43 // loop_header
                %s464 = sphi 0, %s466
                %p465 = scmp.ge.s32.totalorder %s464, %s457
                %s469 = sphi 0, %s476
                %s470 = sphi %s460, %s479
                %s471 = sphi %s462, %s480
              $region54: #{tpu_custom_call.1} parent=43 // loop_header_branch
                %468 = sbr.rel (%p465) target = $region58
              $region55: #{tpu_custom_call.1} parent=43 // loop_body
                %v472 = vld [vmem:[%s470] sm:%s422]
                %473 = vst [vmem:[%s471] sm:%s422] %v472
                %s474 = sadd.s32 1, %s469
                %p475 = scmp.ge.s32.totalorder %s474, %s457
                %s476 = scalar_select %p475, 0, %s474
                %s477 = smul.u32 %s476, 8
                %s478 = smul.u32 %s476, 8
                %s479 = scalar_lea.vmem %s460, %s477 [#allocation2]
                %s480 = scalar_lea.vmem %s462, %s478
              $region56: #{tpu_custom_call.1} parent=43 // loop_footer
                %s466 = sadd.s32 %s464, 1
              $region57: #{tpu_custom_call.1} parent=43 // loop_footer_branch
                %463 = sbr.rel target = $region53
              $region58: #{tpu_custom_call.1} parent=43 // loop_exit
                _
            $region44: #{tpu_custom_call.1} parent=35 // pred_fallthru
              _
          $region36: #{tpu_custom_call.1} parent=31 // pred_fallthru
            _
          %543 = vnop
        $region32: #{tpu_custom_call.1} parent=27 // pred_fallthru
          _
      $region28: #{tpu_custom_call.1} parent=5 // pred_fallthru
        _
      %p544 = scmp.le.s32.totalorder 2, %s8
      // Predicated region
      $region81: #{tpu_custom_call.1} parent=5 // pred_check
        %p545 = pneg %p544
      $region82: #{tpu_custom_call.1} parent=5 // pred_check_branch
        %547 = sbr.rel (%p545) target = $region84
      $region83: #{tpu_custom_call.1} parent=5 // pred_region
        %s548 = ssub.s32 %s8, 2
        // Predicated region
        $region85: #{tpu_custom_call.1} parent=83 // pred_check
          %p549 = pneg %p84
        $region86: #{tpu_custom_call.1} parent=83 // pred_check_branch
          %551 = sbr.rel (%p549) target = $region88
        $region87: #{tpu_custom_call.1} parent=83 // pred_region
          %s552 = sand.u32 %s69, 1
          %s553 = sand.u32 %s69, 1
          %s554 = smul.addr %s553, 64
          %s555 = scalar_lea.vmem [#allocation2], %s554
        $region88: #{tpu_custom_call.1} parent=83 // pred_fallthru
          _
      $region84: #{tpu_custom_call.1} parent=5 // pred_fallthru
        _
    $region6: #{tpu_custom_call.1} parent=1 // loop_footer
      %s12 = sadd.s32 1, %s8
    $region7: #{tpu_custom_call.1} parent=1 // loop_footer_branch
      %7 = sbr.rel target = $region3
    $region8: #{tpu_custom_call.1} parent=1 // loop_exit
      _

</llo_original>
